<compile_context>
chip_gen: v5e
topology: v5e:2x2
jax: 0.10.0
libtpu: 0.0.40
codegen_flags: <defaults>
</compile_context>

<pallas_src>
import functools

import jax
import jax.numpy as jnp
from jax.experimental import pallas as pl
from jax.experimental.pallas import tpu as pltpu

_BN_EPS = 1e-5
_K = 5  # transposed-conv kernel size


def _compiler_params(semantics):
    return pltpu.CompilerParams(
        dimension_semantics=semantics,
        vmem_limit_bytes=32 * 1024 * 1024,
    )


# ----------------------------- Pallas kernels ------------------------------

def _linear_bn_relu_kernel(x_ref, w_ref, g_ref, b_ref, o_ref):
    # (N, in_dim) @ (in_dim, D) on the MXU: bf16 operands, f32 accumulation.
    y = jnp.dot(x_ref[...], w_ref[...], preferred_element_type=jnp.float32)
    # Training-mode BatchNorm1d folded into one scale/shift (single-pass stats).
    mean = jnp.mean(y, axis=0, keepdims=True)
    var = jnp.maximum(jnp.mean(y * y, axis=0, keepdims=True) - mean * mean, 0.0)
    scale = g_ref[...] * jax.lax.rsqrt(var + _BN_EPS)
    shift = b_ref[...] - mean * scale
    o_ref[...] = jnp.maximum(y * scale + shift, 0.0).astype(o_ref.dtype)


def _accumulate_taps(x_ref, w_ref, oh, ow):
    """sum_{kh,kw} window(kh,kw) @ w[kh,kw]  over the zero-dilated input.

    x_ref: (Nblk, oh+4, ow+4, Cin) bf16  -- deconv rewritten as a stride-1
           conv over the stride-2 dilated, (2,3)-padded input (25 static taps).
    w_ref: (25, Cin, Cout) bf16.  Returns f32 (Nblk*oh*ow, Cout).
    """
    nblk = x_ref.shape[0]
    cin = x_ref.shape[3]
    cout = w_ref.shape[2]
    m = nblk * oh * ow
    acc = jnp.zeros((m, cout), jnp.float32)
    t = 0
    for kh in range(_K):
        for kw in range(_K):
            xs = x_ref[:, kh:kh + oh, kw:kw + ow, :]
            # Collapse leading dims in f32 (clean (8,128)-tiled reshape), then
            # feed the MXU in bf16 with f32 accumulation.
            xs = xs.astype(jnp.float32).reshape(m, cin).astype(jnp.bfloat16)
            acc = acc + jnp.dot(xs, w_ref[t], preferred_element_type=jnp.float32)
            t += 1
    return acc


def _deconv_bn_relu_kernel(x_ref, w_ref, g_ref, b_ref, o_ref, *, oh, ow):
    acc = _accumulate_taps(x_ref, w_ref, oh, ow)
    # ConvTranspose2d(bias=False) -> no bias; BN folded into one FMA.
    mean = jnp.mean(acc, axis=0, keepdims=True)
    var = jnp.maximum(jnp.mean(acc * acc, axis=0, keepdims=True) - mean * mean, 0.0)
    scale = g_ref[...] * jax.lax.rsqrt(var + _BN_EPS)
    shift = b_ref[...] - mean * scale
    o_ref[...] = jnp.maximum(acc * scale + shift, 0.0).astype(o_ref.dtype)


def _deconv_bias_tanh_kernel(x_ref, w_ref, bias_ref, o_ref, *, oh, ow):
    acc = _accumulate_taps(x_ref, w_ref, oh, ow)
    o_ref[...] = jnp.tanh(acc + bias_ref[...]).astype(o_ref.dtype)


# ------------------------------ layer wrappers ------------------------------

def _linear_bn_relu(x, w, gamma, beta):
    n = x.shape[0]
    d = w.shape[1]
    return pl.pallas_call(
        _linear_bn_relu_kernel,
        out_shape=jax.ShapeDtypeStruct((n, d), jnp.bfloat16),
        grid=(1,),
        in_specs=[
            pl.BlockSpec((n, x.shape[1]), lambda i: (0, 0)),
            pl.BlockSpec((x.shape[1], d), lambda i: (0, 0)),
            pl.BlockSpec((1, d), lambda i: (0, 0)),
            pl.BlockSpec((1, d), lambda i: (0, 0)),
        ],
        out_specs=pl.BlockSpec((n, d), lambda i: (0, 0)),
        compiler_params=_compiler_params(("arbitrary",)),
    )(x.astype(jnp.bfloat16), w.astype(jnp.bfloat16),
      gamma.reshape(1, d), beta.reshape(1, d))


def _dilate_pad(x):
    # ConvTranspose2d(k=5, stride=2, padding=2, output_padding=1) ==
    # stride-1 conv over the input dilated by 2 and padded (low=2, high=3).
    zero = jnp.asarray(0, x.dtype)
    return jax.lax.pad(x, zero, ((0, 0, 0), (2, 3, 1), (2, 3, 1), (0, 0, 0)))


def _deconv_bn_relu(x_nhwc, w_conv, gamma, beta):
    n, h, w_sp, cin = x_nhwc.shape
    cout = w_conv.shape[-1]
    oh, ow = 2 * h, 2 * w_sp
    m = n * oh * ow
    xdp = _dilate_pad(x_nhwc.astype(jnp.bfloat16))
    wk = w_conv.reshape(_K * _K, cin, cout).astype(jnp.bfloat16)
    kernel = functools.partial(_deconv_bn_relu_kernel, oh=oh, ow=ow)
    # Whole batch resident (grid=(1,)) -> exact full-batch BN statistics.
    out = pl.pallas_call(
        kernel,
        out_shape=jax.ShapeDtypeStruct((m, cout), jnp.bfloat16),
        grid=(1,),
        in_specs=[
            pl.BlockSpec(xdp.shape, lambda i: (0, 0, 0, 0)),
            pl.BlockSpec(wk.shape, lambda i: (0, 0, 0)),
            pl.BlockSpec((1, cout), lambda i: (0, 0)),
            pl.BlockSpec((1, cout), lambda i: (0, 0)),
        ],
        out_specs=pl.BlockSpec((m, cout), lambda i: (0, 0)),
        compiler_params=_compiler_params(("arbitrary",)),
    )(xdp, wk, gamma.reshape(1, cout), beta.reshape(1, cout))
    return out.reshape(n, oh, ow, cout)


def _deconv_bias_tanh(x_nhwc, w_conv, bias):
    n, h, w_sp, cin = x_nhwc.shape
    cout = w_conv.shape[-1]
    oh, ow = 2 * h, 2 * w_sp
    m_blk = oh * ow
    xdp = _dilate_pad(x_nhwc.astype(jnp.bfloat16))
    wk = w_conv.reshape(_K * _K, cin, cout).astype(jnp.bfloat16)
    kernel = functools.partial(_deconv_bias_tanh_kernel, oh=oh, ow=ow)
    # No BN here -> tile over the batch ("parallel" for v7x megacore) and
    # bound VMEM use of the largest layer.
    out = pl.pallas_call(
        kernel,
        out_shape=jax.ShapeDtypeStruct((n * m_blk, cout), jnp.float32),
        grid=(n,),
        in_specs=[
            pl.BlockSpec((1,) + xdp.shape[1:], lambda b: (b, 0, 0, 0)),
            pl.BlockSpec(wk.shape, lambda b: (0, 0, 0)),
            pl.BlockSpec((1, cout), lambda b: (0, 0)),
        ],
        out_specs=pl.BlockSpec((m_blk, cout), lambda b: (b, 0)),
        compiler_params=_compiler_params(("parallel",)),
    )(xdp, wk, bias.reshape(1, cout))
    return out.reshape(n, oh, ow, cout)


# --------------------------------- model ------------------------------------

def init_params(key, in_dim=16, dim=8):
    keys = jax.random.split(key, 8)
    d_l1 = dim * 8 * 4 * 4
    params = {
        "l1": dict(
            w=0.1 * jax.random.normal(keys[0], (in_dim, d_l1), jnp.float32),
            gamma=1.0 + 0.02 * jax.random.normal(keys[1], (d_l1,), jnp.float32),
            beta=jnp.zeros((d_l1,), jnp.float32),
        ),
        "deconvs": [],
    }
    chans = [(dim * 8, dim * 4), (dim * 4, dim * 2), (dim * 2, dim), (dim, 3)]
    for li, (cin, cout) in enumerate(chans):
        k_w, k_g, k_b = jax.random.split(keys[2 + li], 3)
        # PyTorch ConvTranspose2d weight: (Cin, Cout, KH, KW), N(0, 0.02).
        w_pt = 0.02 * jax.random.normal(k_w, (cin, cout, _K, _K), jnp.float32)
        # Equivalent stride-1 conv weight (HWIO) over the dilated input:
        #   w_conv[kh, kw, ci, co] = w_pt[ci, co, K-1-kh, K-1-kw]
        w_conv = jnp.transpose(w_pt, (2, 3, 0, 1))[::-1, ::-1]
        last = li == len(chans) - 1
        layer = dict(w=w_conv, use_bn=not last)
        if last:
            layer["bias"] = 0.02 * jax.random.normal(k_b, (cout,), jnp.float32)
        else:
            layer["gamma"] = 1.0 + 0.02 * jax.random.normal(k_g, (cout,), jnp.float32)
            layer["beta"] = jnp.zeros((cout,), jnp.float32)
        params["deconvs"].append(layer)
    return params


def generator_forward(x, params):
    """x: (N, in_dim) -> (N, 3, 64, 64); Generator.forward with training-mode BN."""
    n = x.shape[0]
    p1 = params["l1"]
    y = _linear_bn_relu(x, p1["w"], p1["gamma"], p1["beta"])   # (N, dim*8*16) bf16
    h = y.reshape(n, -1, 4, 4).transpose(0, 2, 3, 1)           # NCHW view -> NHWC
    for layer in params["deconvs"]:
        if layer["use_bn"]:
            h = _deconv_bn_relu(h, layer["w"], layer["gamma"], layer["beta"])
        else:
            h = _deconv_bias_tanh(h, layer["w"], layer["bias"])  # (N,64,64,3) f32
    return jnp.transpose(h, (0, 3, 1, 2))                        # NHWC -> NCHW


def reference_forward(x, params):
    """Pure-JAX reference with the same bf16-operand / f32-accumulate policy."""
    p1 = params["l1"]
    y = jnp.dot(x.astype(jnp.bfloat16), p1["w"].astype(jnp.bfloat16),
                preferred_element_type=jnp.float32)
    mean = jnp.mean(y, axis=0, keepdims=True)
    var = jnp.mean(jnp.square(y - mean), axis=0, keepdims=True)
    y = (y - mean) * jax.lax.rsqrt(var + _BN_EPS) * p1["gamma"] + p1["beta"]
    n = x.shape[0]
    h = jnp.maximum(y, 0.0).astype(jnp.bfloat16).reshape(n, -1, 4, 4)
    h = h.transpose(0, 2, 3, 1)
    for layer in params["deconvs"]:
        y = jax.lax.conv_general_dilated(
            h, layer["w"].astype(jnp.bfloat16),
            window_strides=(1, 1), padding=((2, 3), (2, 3)),
            lhs_dilation=(2, 2),
            dimension_numbers=("NHWC", "HWIO", "NHWC"),
            preferred_element_type=jnp.float32)
        if layer["use_bn"]:
            mean = jnp.mean(y, axis=(0, 1, 2), keepdims=True)
            var = jnp.mean(jnp.square(y - mean), axis=(0, 1, 2), keepdims=True)
            y = (y - mean) * jax.lax.rsqrt(var + _BN_EPS) * layer["gamma"] + layer["beta"]
            h = jnp.maximum(y, 0.0).astype(jnp.bfloat16)
        else:
            h = jnp.tanh(y + layer["bias"])
    return jnp.transpose(h, (0, 3, 1, 2)).astype(jnp.float32)


if __name__ == "__main__":
    key = jax.random.PRNGKey(0)
    kx, kp = jax.random.split(key)
    batch, in_dim, dim = 2, 16, 8          # output spatial is architecturally 64x64
    x = jax.random.normal(kx, (batch, in_dim), jnp.float32)
    params = init_params(kp, in_dim=in_dim, dim=dim)

    out = jax.block_until_ready(generator_forward(x, params))
    ref = jax.block_until_ready(reference_forward(x, params))

    assert out.shape == (batch, 3, 64, 64), out.shape
    max_err = float(jnp.max(jnp.abs(out - ref)))
    assert max_err < 5e-3, max_err
    print("KERNEL_OK")
</pallas_src>

<mosaic_0001>
module attributes {stable_mosaic.version = 11 : i64} {
  func.func @_linear_bn_relu_kernel(%arg0: i32, %arg1: memref<2x16xbf16, #tpu.memory_space<vmem>>, %arg2: memref<16x1024xbf16, #tpu.memory_space<vmem>>, %arg3: memref<1x1024xf32, #tpu.memory_space<vmem>>, %arg4: memref<1x1024xf32, #tpu.memory_space<vmem>>, %arg5: memref<2x1024xbf16, #tpu.memory_space<vmem>>) attributes {dimension_semantics = [#tpu.dimension_semantics<arbitrary>], iteration_bounds = array<i64: 1>, scalar_prefetch = 0 : i64, scratch_operands = 0 : i64, tpu.core_type = #tpu.core_type<tc>, window_params = [{pipeline_mode = #tpu.pipeline_mode<synchronous>, transform_indices = @transform_0, window_bounds = array<i64: 2, 16>}, {pipeline_mode = #tpu.pipeline_mode<synchronous>, transform_indices = @transform_1, window_bounds = array<i64: 16, 1024>}, {pipeline_mode = #tpu.pipeline_mode<synchronous>, transform_indices = @transform_2, window_bounds = array<i64: 1, 1024>}, {pipeline_mode = #tpu.pipeline_mode<synchronous>, transform_indices = @transform_3, window_bounds = array<i64: 1, 1024>}, {pipeline_mode = #tpu.pipeline_mode<synchronous>, transform_indices = @transform_4, window_bounds = array<i64: 2, 1024>}]} {
    %c0 = arith.constant 0 : index
    %c0_0 = arith.constant 0 : index
    %0 = vector.load %arg1[%c0, %c0_0] : memref<2x16xbf16, #tpu.memory_space<vmem>>, vector<2x16xbf16>
    %c0_1 = arith.constant 0 : index
    %c0_2 = arith.constant 0 : index
    %1 = vector.load %arg2[%c0_1, %c0_2] : memref<16x1024xbf16, #tpu.memory_space<vmem>>, vector<16x1024xbf16>
    %cst = arith.constant dense<0.000000e+00> : vector<2x1024xf32>
    %2 = tpu.matmul %0, %1, %cst {dimension_numbers = #tpu.dot_dimension_numbers<[1], [0], [0], [1], [0, 0, 1, 1], [], []>} : vector<2x16xbf16>, vector<16x1024xbf16>, vector<2x1024xf32> -> vector<2x1024xf32>
    %cst_3 = arith.constant dense<0.000000e+00> : vector<1024xf32>
    %3 = vector.multi_reduction <add>, %2, %cst_3 [0] : vector<2x1024xf32> to vector<1024xf32>
    %4 = vector.shape_cast %3 : vector<1024xf32> to vector<1x1024xf32>
    %cst_4 = arith.constant 2.000000e+00 : f32
    %5 = vector.broadcast %cst_4 : f32 to vector<1x1024xf32>
    %6 = arith.divf %4, %5 : vector<1x1024xf32>
    %7 = arith.mulf %2, %2 : vector<2x1024xf32>
    %cst_5 = arith.constant dense<0.000000e+00> : vector<1024xf32>
    %8 = vector.multi_reduction <add>, %7, %cst_5 [0] : vector<2x1024xf32> to vector<1024xf32>
    %9 = vector.shape_cast %8 : vector<1024xf32> to vector<1x1024xf32>
    %cst_6 = arith.constant 2.000000e+00 : f32
    %10 = vector.broadcast %cst_6 : f32 to vector<1x1024xf32>
    %11 = arith.divf %9, %10 : vector<1x1024xf32>
    %12 = arith.mulf %6, %6 : vector<1x1024xf32>
    %13 = arith.subf %11, %12 : vector<1x1024xf32>
    %cst_7 = arith.constant 0.000000e+00 : f32
    %14 = vector.broadcast %cst_7 : f32 to vector<1x1024xf32>
    %15 = arith.maximumf %13, %14 : vector<1x1024xf32>
    %c0_8 = arith.constant 0 : index
    %c0_9 = arith.constant 0 : index
    %16 = vector.load %arg3[%c0_8, %c0_9] : memref<1x1024xf32, #tpu.memory_space<vmem>>, vector<1x1024xf32>
    %cst_10 = arith.constant 9.99999974E-6 : f32
    %17 = vector.broadcast %cst_10 : f32 to vector<1x1024xf32>
    %18 = arith.addf %15, %17 : vector<1x1024xf32>
    %19 = math.rsqrt %18 : vector<1x1024xf32>
    %20 = arith.mulf %16, %19 : vector<1x1024xf32>
    %c0_11 = arith.constant 0 : index
    %c0_12 = arith.constant 0 : index
    %21 = vector.load %arg4[%c0_11, %c0_12] : memref<1x1024xf32, #tpu.memory_space<vmem>>, vector<1x1024xf32>
    %22 = arith.mulf %6, %20 : vector<1x1024xf32>
    %23 = arith.subf %21, %22 : vector<1x1024xf32>
    %24 = vector.broadcast %20 : vector<1x1024xf32> to vector<2x1024xf32>
    %25 = arith.mulf %2, %24 : vector<2x1024xf32>
    %26 = vector.broadcast %23 : vector<1x1024xf32> to vector<2x1024xf32>
    %27 = arith.addf %25, %26 : vector<2x1024xf32>
    %cst_13 = arith.constant 0.000000e+00 : f32
    %28 = vector.broadcast %cst_13 : f32 to vector<2x1024xf32>
    %29 = arith.maximumf %27, %28 : vector<2x1024xf32>
    %30 = arith.truncf %29 : vector<2x1024xf32> to vector<2x1024xbf16>
    %c0_14 = arith.constant 0 : index
    %c0_15 = arith.constant 0 : index
    %31 = vector.load %arg5[%c0_14, %c0_15] : memref<2x1024xbf16, #tpu.memory_space<vmem>>, vector<2x1024xbf16>
    tpu.vector_store %arg5[%c0_14, %c0_15], %30 {strides = array<i32>} : memref<2x1024xbf16, #tpu.memory_space<vmem>>, vector<2x1024xbf16>,
    return
  }
  func.func @transform_0(%arg0: i32) -> (i32, i32) {
    %c0_i32 = arith.constant 0 : i32
    %c0_i32_0 = arith.constant 0 : i32
    %c0_i32_1 = arith.constant 0 : i32
    return %c0_i32, %c0_i32_0 : i32, i32
  }
  func.func @transform_1(%arg0: i32) -> (i32, i32) {
    %c0_i32 = arith.constant 0 : i32
    %c0_i32_0 = arith.constant 0 : i32
    %c0_i32_1 = arith.constant 0 : i32
    return %c0_i32, %c0_i32_0 : i32, i32
  }
  func.func @transform_2(%arg0: i32) -> (i32, i32) {
    %c0_i32 = arith.constant 0 : i32
    %c0_i32_0 = arith.constant 0 : i32
    %c0_i32_1 = arith.constant 0 : i32
    return %c0_i32, %c0_i32_0 : i32, i32
  }
  func.func @transform_3(%arg0: i32) -> (i32, i32) {
    %c0_i32 = arith.constant 0 : i32
    %c0_i32_0 = arith.constant 0 : i32
    %c0_i32_1 = arith.constant 0 : i32
    return %c0_i32, %c0_i32_0 : i32, i32
  }
  func.func @transform_4(%arg0: i32) -> (i32, i32) {
    %c0_i32 = arith.constant 0 : i32
    %c0_i32_0 = arith.constant 0 : i32
    %c0_i32_1 = arith.constant 0 : i32
    return %c0_i32, %c0_i32_0 : i32, i32
  }
}

</mosaic_0001>

<llo_original>
// kernel: tpu_custom_call.1
$region0: #{tpu_custom_call.1}
  #allocation0 [shape = 'u32[]', space=smem, size = 0x4, offset = 0x4, fixed_abs, tag = 'smem constant byte address 0x4 - core index']
  #allocation1 [shape = 'u32[72,128]{1,0:T(1,128)}', space=vmem, size = 0x9000, scoped, tag = 'internal scratch']
  %s0 = inlined_call_operand.hbm [shape: bf16[2,16], index: 0, kind: input, shape index: {}]
  %s1 = inlined_call_operand.hbm [shape: bf16[16,1024], index: 1, kind: input, shape index: {}]
  %s2 = inlined_call_operand.hbm [shape: f32[1,1024], index: 2, kind: input, shape index: {}]
  %s3 = inlined_call_operand.hbm [shape: f32[1,1024], index: 3, kind: input, shape index: {}]
  %s4 = inlined_call_operand.hbm [shape: bf16[2,1024], index: 4, kind: output, shape index: {}]
  %s5 = sld [smem:[#allocation0]]
  $region42: #{tpu_custom_call.1} parent=0
    _
  %s7 = ssub.s32 1, %s5
  %s8 = scalar_select 0, %s7, %s5
  $region1: #{tpu_custom_call.1} parent=0
    #allocation2 [shape = 'u8[512]{0}', space=vmem, size = 0x400, scoped, tag = 'input window, operand 0, single buffered']
    #allocation3 [shape = 's32[1]{0}', space=sflag, size = 0x4, scoped, tag = 'scoped memory for tpu_custom_call.1']
    #allocation4 [shape = 's32[1]{0}', space=sflag, size = 0x4, scoped, tag = 'scoped memory for tpu_custom_call.1']
    #allocation5 [shape = 'u8[32768]{0}', space=vmem, size = 0x8000, scoped, tag = 'input window, operand 1, single buffered']
    #allocation6 [shape = 's32[1]{0}', space=sflag, size = 0x4, scoped, tag = 'scoped memory for tpu_custom_call.1']
    #allocation7 [shape = 'u8[4096]{0}', space=vmem, size = 0x1000, scoped, tag = 'input window, operand 2, single buffered']
    #allocation8 [shape = 'u8[4096]{0}', space=vmem, size = 0x1000, scoped, tag = 'input window, operand 3, single buffered']
    #allocation9 [shape = 's32[1]{0}', space=sflag, size = 0x4, scoped, tag = 'scoped memory for tpu_custom_call.1']
    #allocation10 [shape = 'u8[4096]{0}', space=vmem, size = 0x1000, scoped, tag = 'output window, operand 0, single buffered']
    %9 = vsyncpa [#allocation3], 0
    %10 = vsyncpa [#allocation6], 0
    %11 = vsyncpa [#allocation9], 0
    %12 = vsyncpa [#allocation4], 0
    // Predicated region
    $region2: #{tpu_custom_call.1} parent=1 // pred_check
      _
    $region3: #{tpu_custom_call.1} parent=1 // pred_check_branch
      %14 = sbr.rel (0) target = $region5
    $region4: #{tpu_custom_call.1} parent=1 // pred_region
      %16 = vsyncadd [#allocation3], 0
      %s18 = sshll.u32 %s0, 4
      %s19 = int_to_ptr.hbm [resolvable:$true] %s18
      %s20 = sshll.u32 [#allocation2], 4
      %s21 = int_to_ptr.vmem [resolvable:$true] %s20
      %23 = dma.hbm_to_vmem [thread:$0]  %s19, 16, %s21, [#allocation3]
    $region5: #{tpu_custom_call.1} parent=1 // pred_fallthru
      _
    // Predicated region
    $region6: #{tpu_custom_call.1} parent=1 // pred_check
      _
    $region7: #{tpu_custom_call.1} parent=1 // pred_check_branch
      %25 = sbr.rel (0) target = $region9
    $region8: #{tpu_custom_call.1} parent=1 // pred_region
      %27 = vsyncadd [#allocation6], 0
      %s28 = sshll.u32 %s1, 4
      %s29 = int_to_ptr.hbm [resolvable:$true] %s28
      %s30 = sshll.u32 [#allocation5], 4
      %s31 = int_to_ptr.vmem [resolvable:$true] %s30
      %36 = dma.hbm_to_vmem [thread:$0]  %s29, 1024, %s31, [#allocation6], 512, 512, 32
    $region9: #{tpu_custom_call.1} parent=1 // pred_fallthru
      _
    // Predicated region
    $region10: #{tpu_custom_call.1} parent=1 // pred_check
      _
    $region11: #{tpu_custom_call.1} parent=1 // pred_check_branch
      %38 = sbr.rel (0) target = $region13
    $region12: #{tpu_custom_call.1} parent=1 // pred_region
      %40 = vsyncadd [#allocation6], 0
      %s42 = sshll.u32 %s2, 4
      %s43 = int_to_ptr.hbm [resolvable:$true] %s42
      %s44 = sshll.u32 [#allocation7], 4
      %s45 = int_to_ptr.vmem [resolvable:$true] %s44
      %47 = dma.hbm_to_vmem [thread:$0]  %s43, 128, %s45, [#allocation6]
    $region13: #{tpu_custom_call.1} parent=1 // pred_fallthru
      _
    // Predicated region
    $region14: #{tpu_custom_call.1} parent=1 // pred_check
      _
    $region15: #{tpu_custom_call.1} parent=1 // pred_check_branch
      %49 = sbr.rel (0) target = $region17
    $region16: #{tpu_custom_call.1} parent=1 // pred_region
      %51 = vsyncadd [#allocation9], 0
      %s53 = sshll.u32 %s3, 4
      %s54 = int_to_ptr.hbm [resolvable:$true] %s53
      %s55 = sshll.u32 [#allocation8], 4
      %s56 = int_to_ptr.vmem [resolvable:$true] %s55
      %58 = dma.hbm_to_vmem [thread:$0]  %s54, 128, %s56, [#allocation9]
    $region17: #{tpu_custom_call.1} parent=1 // pred_fallthru
      _
    // Predicated region
    $region18: #{tpu_custom_call.1} parent=1 // pred_check
      _
    $region19: #{tpu_custom_call.1} parent=1 // pred_check_branch
      %60 = sbr.rel (0) target = $region21
    $region20: #{tpu_custom_call.1} parent=1 // pred_region
      %62 = dma.done [#allocation3], 16
    $region21: #{tpu_custom_call.1} parent=1 // pred_fallthru
      _
    // Predicated region
    $region22: #{tpu_custom_call.1} parent=1 // pred_check
      _
    $region23: #{tpu_custom_call.1} parent=1 // pred_check_branch
      %64 = sbr.rel (0) target = $region25
    $region24: #{tpu_custom_call.1} parent=1 // pred_region
      %66 = dma.done [#allocation6], 1024
    $region25: #{tpu_custom_call.1} parent=1 // pred_fallthru
      _
    // Predicated region
    $region26: #{tpu_custom_call.1} parent=1 // pred_check
      _
    $region27: #{tpu_custom_call.1} parent=1 // pred_check_branch
      %68 = sbr.rel (0) target = $region29
    $region28: #{tpu_custom_call.1} parent=1 // pred_region
      %70 = dma.done [#allocation6], 128
    $region29: #{tpu_custom_call.1} parent=1 // pred_fallthru
      _
    // Predicated region
    $region30: #{tpu_custom_call.1} parent=1 // pred_check
      _
    $region31: #{tpu_custom_call.1} parent=1 // pred_check_branch
      %72 = sbr.rel (0) target = $region33
    $region32: #{tpu_custom_call.1} parent=1 // pred_region
      %74 = dma.done [#allocation9], 128
    $region33: #{tpu_custom_call.1} parent=1 // pred_fallthru
      _
    %v76 = vld [vmem:[#allocation2] sm:$0x1]
    %v77 = vld [vmem:[#allocation5] sm:$0xff]
    %v78 = vld [vmem:[#allocation5 + $0x8] sm:$0xff]
    %v79 = vld [vmem:[#allocation5 + $0x10] sm:$0xff]
    %v80 = vld [vmem:[#allocation5 + $0x18] sm:$0xff]
    %v81 = vld [vmem:[#allocation5 + $0x20] sm:$0xff]
    %v82 = vld [vmem:[#allocation5 + $0x28] sm:$0xff]
    %v83 = vld [vmem:[#allocation5 + $0x30] sm:$0xff]
    %v84 = vld [vmem:[#allocation5 + $0x38] sm:$0xff]
    %v93 = vunpack.c.l.b16 %v77
    %v94 = vunpack.c.h.b16 %v77
    %v95 = vunpack.c.l.b16 %v78
    %v96 = vunpack.c.h.b16 %v78
    %v97 = vunpack.c.l.b16 %v79
    %v98 = vunpack.c.h.b16 %v79
    %v99 = vunpack.c.l.b16 %v80
    %v100 = vunpack.c.h.b16 %v80
    %v101 = vunpack.c.l.b16 %v81
    %v102 = vunpack.c.h.b16 %v81
    %v103 = vunpack.c.l.b16 %v82
    %v104 = vunpack.c.h.b16 %v82
    %v105 = vunpack.c.l.b16 %v83
    %v106 = vunpack.c.h.b16 %v83
    %v107 = vunpack.c.l.b16 %v84
    %v108 = vunpack.c.h.b16 %v84
    %v109 = vpack.c.b16 %v101, %v93
    %v110 = vpack.c.b16 %v102, %v94
    %v111 = vpack.c.b16 %v103, %v95
    %v112 = vpack.c.b16 %v104, %v96
    %v113 = vpack.c.b16 %v105, %v97
    %v114 = vpack.c.b16 %v106, %v98
    %v115 = vpack.c.b16 %v107, %v99
    %v116 = vpack.c.b16 %v108, %v100
    %vm125 = vcmask 130048
    %v127 = vsel %vm125, %v76, 0
    %129 = vmatpush.bf16.msra.mxu0 0
    %130 = vmatpush.bf16.msra.mxu0 0
    %131 = vmatpush.bf16.msra.mxu0 0
    %132 = vmatpush.bf16.msra.mxu0 0
    %133 = vmatpush.bf16.msra.mxu0 0
    %134 = vmatpush.bf16.msra.mxu0 0
    %135 = vmatpush.bf16.msra.mxu0 0
    %136 = vmatpush.bf16.msra.mxu0 %v109
    %137 = vmatmul.bf16.gmra.mxu0 %v127
    %v138 = vpop.f32.mrf.mxu0
    %v139 = vadd.f32 0.0, %v138
    %v140 = vpop.f32.mrf.mxu0
    %141 = vdwg.mxu0
    %142 = vmatpush.bf16.msra.mxu0 0
    %143 = vmatpush.bf16.msra.mxu0 0
    %144 = vmatpush.bf16.msra.mxu0 0
    %145 = vmatpush.bf16.msra.mxu0 0
    %146 = vmatpush.bf16.msra.mxu0 0
    %147 = vmatpush.bf16.msra.mxu0 0
    %148 = vmatpush.bf16.msra.mxu0 0
    %149 = vmatpush.bf16.msra.mxu0 %v110
    %150 = vmatmul.bf16.gmra.mxu0 %v127
    %v151 = vpop.f32.mrf.mxu0
    %v152 = vadd.f32 0.0, %v151
    %v153 = vpop.f32.mrf.mxu0
    %154 = vdwg.mxu0
    %155 = vmatpush.bf16.msra.mxu0 0
    %156 = vmatpush.bf16.msra.mxu0 0
    %157 = vmatpush.bf16.msra.mxu0 0
    %158 = vmatpush.bf16.msra.mxu0 0
    %159 = vmatpush.bf16.msra.mxu0 0
    %160 = vmatpush.bf16.msra.mxu0 0
    %161 = vmatpush.bf16.msra.mxu0 0
    %162 = vmatpush.bf16.msra.mxu0 %v111
    %163 = vmatmul.bf16.gmra.mxu0 %v127
    %v164 = vpop.f32.mrf.mxu0
    %v165 = vadd.f32 0.0, %v164
    %v166 = vpop.f32.mrf.mxu0
    %167 = vdwg.mxu0
    %168 = vmatpush.bf16.msra.mxu0 0
    %169 = vmatpush.bf16.msra.mxu0 0
    %170 = vmatpush.bf16.msra.mxu0 0
    %171 = vmatpush.bf16.msra.mxu0 0
    %172 = vmatpush.bf16.msra.mxu0 0
    %173 = vmatpush.bf16.msra.mxu0 0
    %174 = vmatpush.bf16.msra.mxu0 0
    %175 = vmatpush.bf16.msra.mxu0 %v112
    %176 = vmatmul.bf16.gmra.mxu0 %v127
    %v177 = vpop.f32.mrf.mxu0
    %v178 = vadd.f32 0.0, %v177
    %v179 = vpop.f32.mrf.mxu0
    %180 = vdwg.mxu0
    %181 = vmatpush.bf16.msra.mxu0 0
    %182 = vmatpush.bf16.msra.mxu0 0
    %183 = vmatpush.bf16.msra.mxu0 0
    %184 = vmatpush.bf16.msra.mxu0 0
    %185 = vmatpush.bf16.msra.mxu0 0
    %186 = vmatpush.bf16.msra.mxu0 0
    %187 = vmatpush.bf16.msra.mxu0 0
    %188 = vmatpush.bf16.msra.mxu0 %v113
    %189 = vmatmul.bf16.gmra.mxu0 %v127
    %v190 = vpop.f32.mrf.mxu0
    %v191 = vadd.f32 0.0, %v190
    %v192 = vpop.f32.mrf.mxu0
    %193 = vdwg.mxu0
    %194 = vmatpush.bf16.msra.mxu0 0
    %195 = vmatpush.bf16.msra.mxu0 0
    %196 = vmatpush.bf16.msra.mxu0 0
    %197 = vmatpush.bf16.msra.mxu0 0
    %198 = vmatpush.bf16.msra.mxu0 0
    %199 = vmatpush.bf16.msra.mxu0 0
    %200 = vmatpush.bf16.msra.mxu0 0
    %201 = vmatpush.bf16.msra.mxu0 %v114
    %202 = vmatmul.bf16.gmra.mxu0 %v127
    %v203 = vpop.f32.mrf.mxu0
    %v204 = vadd.f32 0.0, %v203
    %v205 = vpop.f32.mrf.mxu0
    %206 = vdwg.mxu0
    %207 = vmatpush.bf16.msra.mxu0 0
    %208 = vmatpush.bf16.msra.mxu0 0
    %209 = vmatpush.bf16.msra.mxu0 0
    %210 = vmatpush.bf16.msra.mxu0 0
    %211 = vmatpush.bf16.msra.mxu0 0
    %212 = vmatpush.bf16.msra.mxu0 0
    %213 = vmatpush.bf16.msra.mxu0 0
    %214 = vmatpush.bf16.msra.mxu0 %v115
    %215 = vmatmul.bf16.gmra.mxu0 %v127
    %v216 = vpop.f32.mrf.mxu0
    %v217 = vadd.f32 0.0, %v216
    %v218 = vpop.f32.mrf.mxu0
    %219 = vdwg.mxu0
    %220 = vmatpush.bf16.msra.mxu0 0
    %221 = vmatpush.bf16.msra.mxu0 0
    %222 = vmatpush.bf16.msra.mxu0 0
    %223 = vmatpush.bf16.msra.mxu0 0
    %224 = vmatpush.bf16.msra.mxu0 0
    %225 = vmatpush.bf16.msra.mxu0 0
    %226 = vmatpush.bf16.msra.mxu0 0
    %227 = vmatpush.bf16.msra.mxu0 %v116
    %228 = vmatmul.bf16.gmra.mxu0 %v127
    %v229 = vpop.f32.mrf.mxu0
    %v230 = vadd.f32 0.0, %v229
    %v231 = vpop.f32.mrf.mxu0
    %232 = vdwg.mxu0
    %vm233 = vcmask 1041408
    %v234 = vsel %vm233, %v139, 0.0
    %v235 = vrot.slane %v234, 4
    %v236 = vadd.f32 %v234, %v235
    %v237 = vrot.slane %v236, 2
    %v238 = vadd.f32 %v236, %v237
    %v239 = vrot.slane %v238, 1
    %v240 = vadd.f32 %v238, %v239
    %v241 = vsel %vm233, %v152, 0.0
    %v242 = vrot.slane %v241, 4
    %v243 = vadd.f32 %v241, %v242
    %v244 = vrot.slane %v243, 2
    %v245 = vadd.f32 %v243, %v244
    %v246 = vrot.slane %v245, 1
    %v247 = vadd.f32 %v245, %v246
    %v248 = vsel %vm233, %v165, 0.0
    %v249 = vrot.slane %v248, 4
    %v250 = vadd.f32 %v248, %v249
    %v251 = vrot.slane %v250, 2
    %v252 = vadd.f32 %v250, %v251
    %v253 = vrot.slane %v252, 1
    %v254 = vadd.f32 %v252, %v253
    %v255 = vsel %vm233, %v178, 0.0
    %v256 = vrot.slane %v255, 4
    %v257 = vadd.f32 %v255, %v256
    %v258 = vrot.slane %v257, 2
    %v259 = vadd.f32 %v257, %v258
    %v260 = vrot.slane %v259, 1
    %v261 = vadd.f32 %v259, %v260
    %v262 = vsel %vm233, %v191, 0.0
    %v263 = vrot.slane %v262, 4
    %v264 = vadd.f32 %v262, %v263
    %v265 = vrot.slane %v264, 2
    %v266 = vadd.f32 %v264, %v265
    %v267 = vrot.slane %v266, 1
    %v268 = vadd.f32 %v266, %v267
    %v269 = vsel %vm233, %v204, 0.0
    %v270 = vrot.slane %v269, 4
    %v271 = vadd.f32 %v269, %v270
    %v272 = vrot.slane %v271, 2
    %v273 = vadd.f32 %v271, %v272
    %v274 = vrot.slane %v273, 1
    %v275 = vadd.f32 %v273, %v274
    %v276 = vsel %vm233, %v217, 0.0
    %v277 = vrot.slane %v276, 4
    %v278 = vadd.f32 %v276, %v277
    %v279 = vrot.slane %v278, 2
    %v280 = vadd.f32 %v278, %v279
    %v281 = vrot.slane %v280, 1
    %v282 = vadd.f32 %v280, %v281
    %v283 = vsel %vm233, %v230, 0.0
    %v284 = vrot.slane %v283, 4
    %v285 = vadd.f32 %v283, %v284
    %v286 = vrot.slane %v285, 2
    %v287 = vadd.f32 %v285, %v286
    %v288 = vrot.slane %v287, 1
    %v289 = vadd.f32 %v287, %v288
    %v290 = vrcp.pop 2.0
    %v291 = vmul.f32 2.0, %v290
    %v292 = vsub.f32 1.0, %v291
    %v293 = vmul.f32 %v290, %v292
    %v294 = vadd.f32 %v290, %v293
    %vm295 = vweird.f32 %v290
    %v296 = vsel %vm295, %v290, %v294
    %v297 = vmul.f32 %v240, %v296
    %v298 = vmul.f32 %v247, %v296
    %v299 = vmul.f32 %v254, %v296
    %v300 = vmul.f32 %v261, %v296
    %v301 = vmul.f32 %v268, %v296
    %v302 = vmul.f32 %v275, %v296
    %v303 = vmul.f32 %v282, %v296
    %v304 = vmul.f32 %v289, %v296
    %v305 = vmul.f32 %v139, %v139
    %v306 = vmul.f32 %v152, %v152
    %v307 = vmul.f32 %v165, %v165
    %v308 = vmul.f32 %v178, %v178
    %v309 = vmul.f32 %v191, %v191
    %v310 = vmul.f32 %v204, %v204
    %v311 = vmul.f32 %v217, %v217
    %v312 = vmul.f32 %v230, %v230
    %v313 = vsel %vm233, %v305, 0.0
    %v314 = vrot.slane %v313, 4
    %v315 = vadd.f32 %v313, %v314
    %v316 = vrot.slane %v315, 2
    %v317 = vadd.f32 %v315, %v316
    %v318 = vrot.slane %v317, 1
    %v319 = vadd.f32 %v317, %v318
    %v320 = vsel %vm233, %v306, 0.0
    %v321 = vrot.slane %v320, 4
    %v322 = vadd.f32 %v320, %v321
    %v323 = vrot.slane %v322, 2
    %v324 = vadd.f32 %v322, %v323
    %v325 = vrot.slane %v324, 1
    %v326 = vadd.f32 %v324, %v325
    %v327 = vsel %vm233, %v307, 0.0
    %v328 = vrot.slane %v327, 4
    %v329 = vadd.f32 %v327, %v328
    %v330 = vrot.slane %v329, 2
    %v331 = vadd.f32 %v329, %v330
    %v332 = vrot.slane %v331, 1
    %v333 = vadd.f32 %v331, %v332
    %v334 = vsel %vm233, %v308, 0.0
    %v335 = vrot.slane %v334, 4
    %v336 = vadd.f32 %v334, %v335
    %v337 = vrot.slane %v336, 2
    %v338 = vadd.f32 %v336, %v337
    %v339 = vrot.slane %v338, 1
    %v340 = vadd.f32 %v338, %v339
    %v341 = vsel %vm233, %v309, 0.0
    %v342 = vrot.slane %v341, 4
    %v343 = vadd.f32 %v341, %v342
    %v344 = vrot.slane %v343, 2
    %v345 = vadd.f32 %v343, %v344
    %v346 = vrot.slane %v345, 1
    %v347 = vadd.f32 %v345, %v346
    %v348 = vsel %vm233, %v310, 0.0
    %v349 = vrot.slane %v348, 4
    %v350 = vadd.f32 %v348, %v349
    %v351 = vrot.slane %v350, 2
    %v352 = vadd.f32 %v350, %v351
    %v353 = vrot.slane %v352, 1
    %v354 = vadd.f32 %v352, %v353
    %v355 = vsel %vm233, %v311, 0.0
    %v356 = vrot.slane %v355, 4
    %v357 = vadd.f32 %v355, %v356
    %v358 = vrot.slane %v357, 2
    %v359 = vadd.f32 %v357, %v358
    %v360 = vrot.slane %v359, 1
    %v361 = vadd.f32 %v359, %v360
    %v362 = vsel %vm233, %v312, 0.0
    %v363 = vrot.slane %v362, 4
    %v364 = vadd.f32 %v362, %v363
    %v365 = vrot.slane %v364, 2
    %v366 = vadd.f32 %v364, %v365
    %v367 = vrot.slane %v366, 1
    %v368 = vadd.f32 %v366, %v367
    %v369 = vmul.f32 %v319, %v296
    %v370 = vmul.f32 %v326, %v296
    %v371 = vmul.f32 %v333, %v296
    %v372 = vmul.f32 %v340, %v296
    %v373 = vmul.f32 %v347, %v296
    %v374 = vmul.f32 %v354, %v296
    %v375 = vmul.f32 %v361, %v296
    %v376 = vmul.f32 %v368, %v296
    %v377 = vmul.f32 %v297, %v297
    %v378 = vmul.f32 %v298, %v298
    %v379 = vmul.f32 %v299, %v299
    %v380 = vmul.f32 %v300, %v300
    %v381 = vmul.f32 %v301, %v301
    %v382 = vmul.f32 %v302, %v302
    %v383 = vmul.f32 %v303, %v303
    %v384 = vmul.f32 %v304, %v304
    %v385 = vsub.f32 %v369, %v377
    %v386 = vsub.f32 %v370, %v378
    %v387 = vsub.f32 %v371, %v379
    %v388 = vsub.f32 %v372, %v380
    %v389 = vsub.f32 %v373, %v381
    %v390 = vsub.f32 %v374, %v382
    %v391 = vsub.f32 %v375, %v383
    %v392 = vsub.f32 %v376, %v384
    %v393 = vmax.f32 %v385, 0.0
    %v394 = vmax.f32 %v386, 0.0
    %v395 = vmax.f32 %v387, 0.0
    %v396 = vmax.f32 %v388, 0.0
    %v397 = vmax.f32 %v389, 0.0
    %v398 = vmax.f32 %v390, 0.0
    %v399 = vmax.f32 %v391, 0.0
    %v400 = vmax.f32 %v392, 0.0
    %v401 = vld [vmem:[#allocation7] sm:$0xff]
    %v402 = vadd.f32 %v393, 1e-05
    %v403 = vadd.f32 %v394, 1e-05
    %v404 = vadd.f32 %v395, 1e-05
    %v405 = vadd.f32 %v396, 1e-05
    %v406 = vadd.f32 %v397, 1e-05
    %v407 = vadd.f32 %v398, 1e-05
    %v408 = vadd.f32 %v399, 1e-05
    %v409 = vadd.f32 %v400, 1e-05
    %v410 = vrsqrt.pop %v402
    %v411 = vmul.f32 %v410, %v402
    %v412 = vmul.f32 %v411, %v410
    %v413 = vmul.f32 0.5, %v412
    %v414 = vsub.f32 1.5, %v413
    %v415 = vmul.f32 %v410, %v414
    %vm416 = vweird.f32 %v402
    %vm417 = vweird.f32 %v410
    %vm418 = vmor %vm416, %vm417
    %v419 = vsel %vm418, %v410, %v415
    %v420 = vrsqrt.pop %v403
    %v421 = vmul.f32 %v420, %v403
    %v422 = vmul.f32 %v421, %v420
    %v423 = vmul.f32 0.5, %v422
    %v424 = vsub.f32 1.5, %v423
    %v425 = vmul.f32 %v420, %v424
    %vm426 = vweird.f32 %v403
    %vm427 = vweird.f32 %v420
    %vm428 = vmor %vm426, %vm427
    %v429 = vsel %vm428, %v420, %v425
    %v430 = vrsqrt.pop %v404
    %v431 = vmul.f32 %v430, %v404
    %v432 = vmul.f32 %v431, %v430
    %v433 = vmul.f32 0.5, %v432
    %v434 = vsub.f32 1.5, %v433
    %v435 = vmul.f32 %v430, %v434
    %vm436 = vweird.f32 %v404
    %vm437 = vweird.f32 %v430
    %vm438 = vmor %vm436, %vm437
    %v439 = vsel %vm438, %v430, %v435
    %v440 = vrsqrt.pop %v405
    %v441 = vmul.f32 %v440, %v405
    %v442 = vmul.f32 %v441, %v440
    %v443 = vmul.f32 0.5, %v442
    %v444 = vsub.f32 1.5, %v443
    %v445 = vmul.f32 %v440, %v444
    %vm446 = vweird.f32 %v405
    %vm447 = vweird.f32 %v440
    %vm448 = vmor %vm446, %vm447
    %v449 = vsel %vm448, %v440, %v445
    %v450 = vrsqrt.pop %v406
    %v451 = vmul.f32 %v450, %v406
    %v452 = vmul.f32 %v451, %v450
    %v453 = vmul.f32 0.5, %v452
    %v454 = vsub.f32 1.5, %v453
    %v455 = vmul.f32 %v450, %v454
    %vm456 = vweird.f32 %v406
    %vm457 = vweird.f32 %v450
    %vm458 = vmor %vm456, %vm457
    %v459 = vsel %vm458, %v450, %v455
    %v460 = vrsqrt.pop %v407
    %v461 = vmul.f32 %v460, %v407
    %v462 = vmul.f32 %v461, %v460
    %v463 = vmul.f32 0.5, %v462
    %v464 = vsub.f32 1.5, %v463
    %v465 = vmul.f32 %v460, %v464
    %vm466 = vweird.f32 %v407
    %vm467 = vweird.f32 %v460
    %vm468 = vmor %vm466, %vm467
    %v469 = vsel %vm468, %v460, %v465
    %v470 = vrsqrt.pop %v408
    %v471 = vmul.f32 %v470, %v408
    %v472 = vmul.f32 %v471, %v470
    %v473 = vmul.f32 0.5, %v472
    %v474 = vsub.f32 1.5, %v473
    %v475 = vmul.f32 %v470, %v474
    %vm476 = vweird.f32 %v408
    %vm477 = vweird.f32 %v470
    %vm478 = vmor %vm476, %vm477
    %v479 = vsel %vm478, %v470, %v475
    %v480 = vrsqrt.pop %v409
    %v481 = vmul.f32 %v480, %v409
    %v482 = vmul.f32 %v481, %v480
    %v483 = vmul.f32 0.5, %v482
    %v484 = vsub.f32 1.5, %v483
    %v485 = vmul.f32 %v480, %v484
    %vm486 = vweird.f32 %v409
    %vm487 = vweird.f32 %v480
    %vm488 = vmor %vm486, %vm487
    %v489 = vsel %vm488, %v480, %v485
    %v498 = vrot.slane %v429, 7
    %v499 = vrot.slane %v439, 6
    %v500 = vrot.slane %v449, 5
    %v501 = vrot.slane %v459, 4
    %v502 = vrot.slane %v469, 3
    %v503 = vrot.slane %v479, 2
    %v504 = vrot.slane %v489, 1
    %vm505 = vcmask 1040384
    %v506 = vsel %vm505, %v419, %v498
    %vm507 = vcmask 1042434
    %v508 = vsel %vm507, %v499, %v500
    %v509 = vsel %vm233, %v506, %v508
    %vm510 = vcmask 1044484
    %v511 = vsel %vm510, %v501, %v502
    %vm512 = vcmask 1046534
    %v513 = vsel %vm512, %v503, %v504
    %vm514 = vcmask 1045508
    %v515 = vsel %vm514, %v511, %v513
    %vm516 = vcmask 1043456
    %v517 = vsel %vm516, %v509, %v515
    %v519 = vmul.f32 %v401, %v517
    %v520 = vld [vmem:[#allocation8] sm:$0xff]
    %v522 = vperm.slane %v519, 0
    %v523 = vperm.slane %v519, 1
    %v524 = vperm.slane %v519, 2
    %v525 = vperm.slane %v519, 3
    %v526 = vperm.slane %v519, 4
    %v527 = vperm.slane %v519, 5
    %v528 = vperm.slane %v519, 6
    %v529 = vperm.slane %v519, 7
    %v538 = vmul.f32 %v297, %v522
    %v539 = vmul.f32 %v298, %v523
    %v540 = vmul.f32 %v299, %v524
    %v541 = vmul.f32 %v300, %v525
    %v542 = vmul.f32 %v301, %v526
    %v543 = vmul.f32 %v302, %v527
    %v544 = vmul.f32 %v303, %v528
    %v545 = vmul.f32 %v304, %v529
    %v554 = vrot.slane %v539, 7
    %v555 = vrot.slane %v540, 6
    %v556 = vrot.slane %v541, 5
    %v557 = vrot.slane %v542, 4
    %v558 = vrot.slane %v543, 3
    %v559 = vrot.slane %v544, 2
    %v560 = vrot.slane %v545, 1
    %v561 = vsel %vm505, %v538, %v554
    %v562 = vsel %vm507, %v555, %v556
    %v563 = vsel %vm233, %v561, %v562
    %v564 = vsel %vm510, %v557, %v558
    %v565 = vsel %vm512, %v559, %v560
    %v566 = vsel %vm514, %v564, %v565
    %v567 = vsel %vm516, %v563, %v566
    %v569 = vsub.f32 %v520, %v567
    %v570 = vmul.f32 %v139, %v522
    %v571 = vmul.f32 %v152, %v523
    %v572 = vmul.f32 %v165, %v524
    %v573 = vmul.f32 %v178, %v525
    %v574 = vmul.f32 %v191, %v526
    %v575 = vmul.f32 %v204, %v527
    %v576 = vmul.f32 %v217, %v528
    %v577 = vmul.f32 %v230, %v529
    %v579 = vperm.slane %v569, 0
    %v580 = vperm.slane %v569, 1
    %v581 = vperm.slane %v569, 2
    %v582 = vperm.slane %v569, 3
    %v583 = vperm.slane %v569, 4
    %v584 = vperm.slane %v569, 5
    %v585 = vperm.slane %v569, 6
    %v586 = vperm.slane %v569, 7
    %v595 = vadd.f32 %v570, %v579
    %v596 = vadd.f32 %v571, %v580
    %v597 = vadd.f32 %v572, %v581
    %v598 = vadd.f32 %v573, %v582
    %v599 = vadd.f32 %v574, %v583
    %v600 = vadd.f32 %v575, %v584
    %v601 = vadd.f32 %v576, %v585
    %v602 = vadd.f32 %v577, %v586
    %v603 = vmax.f32 %v595, 0.0
    %v604 = vmax.f32 %v596, 0.0
    %v605 = vmax.f32 %v597, 0.0
    %v606 = vmax.f32 %v598, 0.0
    %v607 = vmax.f32 %v599, 0.0
    %v608 = vmax.f32 %v600, 0.0
    %v609 = vmax.f32 %v601, 0.0
    %v610 = vmax.f32 %v602, 0.0
    %v611 = vpack.c.bf16 %v604, %v603
    %v612 = vpack.c.bf16 %v606, %v605
    %v613 = vpack.c.bf16 %v608, %v607
    %v614 = vpack.c.bf16 %v610, %v609
    %v619 = vrot.slane %v611, 3
    %v620 = vrot.slane %v612, 6
    %v621 = vrot.slane %v612, 1
    %v622 = vrot.slane %v613, 4
    %v623 = vrot.slane %v613, 7
    %v624 = vrot.slane %v614, 2
    %v625 = vrot.slane %v614, 5
    %v628 = vsel %vm505, %v611, %v619
    %v631 = vsel %vm507, %v620, %v621
    %v632 = vsel %vm233, %v628, %v631
    %v635 = vsel %vm510, %v622, %v623
    %v638 = vsel %vm512, %v624, %v625
    %v639 = vsel %vm514, %v635, %v638
    %v640 = vsel %vm516, %v632, %v639
    %642 = vst [vmem:[#allocation10] sm:$0xff] %v640
    // Predicated region
    $region34: #{tpu_custom_call.1} parent=1 // pred_check
      _
    $region35: #{tpu_custom_call.1} parent=1 // pred_check_branch
      %644 = sbr.rel (0) target = $region37
    $region36: #{tpu_custom_call.1} parent=1 // pred_region
      %646 = vsyncadd [#allocation4], 0
      %s648 = sshll.u32 [#allocation10], 4
      %s649 = int_to_ptr.vmem [resolvable:$true] %s648
      %s650 = sshll.u32 %s4, 4
      %s651 = int_to_ptr.hbm [resolvable:$true] %s650
      %653 = dma.vmem_to_hbm [thread:$0]  %s649, 128, %s651, [#allocation4]
    $region37: #{tpu_custom_call.1} parent=1 // pred_fallthru
      _
    // Predicated region
    $region38: #{tpu_custom_call.1} parent=1 // pred_check
      _
    $region39: #{tpu_custom_call.1} parent=1 // pred_check_branch
      %655 = sbr.rel (0) target = $region41
    $region40: #{tpu_custom_call.1} parent=1 // pred_region
      %657 = dma.done [#allocation4], 128
    $region41: #{tpu_custom_call.1} parent=1 // pred_fallthru
      _
    %658 = vsyncpa [#allocation3], 1
    %659 = vsyncpa [#allocation6], 1
    %660 = vsyncpa [#allocation9], 1
    %661 = vsyncpa [#allocation4], 1

</llo_original>
